<compile_context>
chip_gen: v7x
topology: tpu7x:2x2x1
jax: 0.10.0
libtpu: 0.0.40
codegen_flags: <defaults>
</compile_context>

<pallas_src>
import functools

import jax
import jax.numpy as jnp
from jax.experimental import pallas as pl
from jax.experimental.pallas import tpu as pltpu

TEMPERATURE = 0.33
STRETCH_LIMITS = (-0.1, 1.1)
EPS = 1e-6


def _gate_mul_kernel(logits_ref, values_ref, out_ref):
    """out = values * clip(sigmoid(logits) * (high - low) + low, 0, 1).

    logits_ref: (1, H) pre-sigmoid gate logits, broadcast over rows.
    values_ref / out_ref: (block_rows, H).
    """
    low, high = STRETCH_LIMITS
    concrete = jax.nn.sigmoid(logits_ref[...].astype(jnp.float32))      # (1, H)
    gates = jnp.clip(concrete * (high - low) + low, 0.0, 1.0)           # (1, H)
    prod = values_ref[...].astype(jnp.float32) * gates                  # broadcast
    out_ref[...] = prod.astype(out_ref.dtype)


def _round_up(x, m):
    return (x + m - 1) // m * m


def _choose_block_rows(rows, hidden, dtype_bytes,
                       target_tile_bytes=4 * 1024 * 1024):
    """Row tile so each values tile is ~4 MiB (multiple of 8 sublanes)."""
    br = max(8, target_tile_bytes // max(1, hidden * dtype_bytes))
    br = max(8, (int(br) // 8) * 8)
    return int(min(br, _round_up(rows, 8)))


def _gated_multiply(values2d, logits, block_rows):
    rows, hidden = values2d.shape
    dtype_bytes = jnp.dtype(values2d.dtype).itemsize

    padded_rows = _round_up(rows, block_rows)
    if padded_rows != rows:
        values2d = jnp.pad(values2d, ((0, padded_rows - rows), (0, 0)))

    grid = (padded_rows // block_rows,)

    tile_bytes = block_rows * hidden * dtype_bytes
    # double-buffered input + output tiles, gate block, plus slack; clamp so it
    # is valid on v5e/v6e/v7x alike (32 MiB scoped is safe on all of them).
    vmem_limit = int(min(max(4 * tile_bytes + 4 * hidden * 4 + (2 << 20),
                             16 << 20),
                         32 << 20))

    cost = pl.CostEstimate(
        flops=3 * padded_rows * hidden,
        transcendentals=hidden * grid[0],
        bytes_accessed=2 * padded_rows * hidden * dtype_bytes + hidden * 4,
    )

    out2d = pl.pallas_call(
        _gate_mul_kernel,
        out_shape=jax.ShapeDtypeStruct((padded_rows, hidden), values2d.dtype),
        grid_spec=pltpu.PrefetchScalarGridSpec(
            num_scalar_prefetch=0,
            grid=grid,
            in_specs=[
                pl.BlockSpec((1, hidden), lambda i: (0, 0)),
                pl.BlockSpec((block_rows, hidden), lambda i: (i, 0)),
            ],
            out_specs=pl.BlockSpec((block_rows, hidden), lambda i: (i, 0)),
        ),
        compiler_params=pltpu.CompilerParams(
            dimension_semantics=("parallel",),
            vmem_limit_bytes=vmem_limit,
        ),
        cost_estimate=cost,
    )(logits, values2d)

    if padded_rows != rows:
        out2d = out2d[:rows]
    return out2d


@functools.partial(jax.jit, static_argnames=("is_train", "block_rows"))
def concrete_gate_forward(values, log_a, rng_key=None, *, is_train=False,
                          block_rows=None):
    """ConcreteGate.forward: values * gates.

    values: (..., H) activations; log_a: gate parameter with H elements
    (e.g. shape (1, 1, H) as in the module docstring). rng_key is used only
    when is_train=True (one uniform draw per gate element, like torch.rand).
    """
    orig_shape = values.shape
    hidden = int(orig_shape[-1])
    rows = 1
    for d in orig_shape[:-1]:
        rows *= int(d)

    values2d = values.reshape(rows, hidden)
    log_a2d = log_a.reshape(1, hidden).astype(jnp.float32)

    if is_train:
        if rng_key is None:
            rng_key = jax.random.PRNGKey(0)
        u = jax.random.uniform(rng_key, (1, hidden), dtype=jnp.float32)
        noise = (1.0 - 2.0 * EPS) * u + EPS
        logits = (jnp.log(noise) - jnp.log1p(-noise) + log_a2d) / TEMPERATURE
    else:
        logits = log_a2d

    if block_rows is None:
        block_rows = _choose_block_rows(rows, hidden,
                                        jnp.dtype(values.dtype).itemsize)

    out2d = _gated_multiply(values2d, logits, block_rows)
    return out2d.reshape(orig_shape)


def concrete_gate_forward_ref(values, log_a, rng_key=None, is_train=False):
    """Pure-JAX reference of ConcreteGate.forward (same RNG convention)."""
    low, high = STRETCH_LIMITS
    hidden = values.shape[-1]
    log_a_b = log_a.reshape(1, hidden).astype(jnp.float32)
    if is_train:
        u = jax.random.uniform(rng_key, (1, hidden), dtype=jnp.float32)
        noise = (1.0 - 2.0 * EPS) * u + EPS
        concrete = jax.nn.sigmoid(
            (jnp.log(noise) - jnp.log1p(-noise) + log_a_b) / TEMPERATURE)
    else:
        concrete = jax.nn.sigmoid(log_a_b)
    gates = jnp.clip(concrete * (high - low) + low, 0.0, 1.0)
    out = values.reshape(-1, hidden).astype(jnp.float32) * gates
    return out.astype(values.dtype).reshape(values.shape)


if __name__ == "__main__":
    key = jax.random.PRNGKey(0)
    k_vals, k_loga, k_noise, k_vals2 = jax.random.split(key, 4)

    # Shapes consistent with the module docstring: values [batch, length, units],
    # gate shape [1, 1, units].
    B, S, H = 2, 8, 128
    values = jax.random.normal(k_vals, (B, S, H), dtype=jnp.float32)

    # xavier_uniform-style init for log_a of shape (1, 1, H):
    # fan_in = fan_out = H -> bound = sqrt(6 / (2H)) = sqrt(3 / H)
    bound = (3.0 / H) ** 0.5
    log_a = jax.random.uniform(k_loga, (1, 1, H), dtype=jnp.float32,
                               minval=-bound, maxval=bound)

    # Eval-mode forward (deterministic).
    out = jax.block_until_ready(
        concrete_gate_forward(values, log_a, is_train=False))
    ref = concrete_gate_forward_ref(values, log_a, is_train=False)
    assert out.shape == values.shape
    assert jnp.allclose(out, ref, atol=1e-5, rtol=1e-5), "eval mismatch vs reference"

    # Train-mode forward (stochastic concrete gate; noise sampled once over
    # log_a's shape, exactly like torch.rand(self.log_a.size())).
    out_train = jax.block_until_ready(
        concrete_gate_forward(values, log_a, rng_key=k_noise, is_train=True))
    ref_train = concrete_gate_forward_ref(values, log_a, rng_key=k_noise,
                                          is_train=True)
    assert out_train.shape == values.shape
    assert jnp.allclose(out_train, ref_train, atol=1e-5, rtol=1e-5), \
        "train mismatch vs reference"

    # Exercise the non-divisible / padded-rows path with a small odd shape
    # (also exercises a bf16 values dtype).
    B2, S2, H2 = 3, 5, 32
    values_odd = jax.random.normal(k_vals2, (B2, S2, H2), dtype=jnp.bfloat16)
    log_a_odd = jnp.zeros((1, 1, H2), dtype=jnp.float32)
    out_odd = jax.block_until_ready(
        concrete_gate_forward(values_odd, log_a_odd, is_train=False))
    ref_odd = concrete_gate_forward_ref(values_odd, log_a_odd, is_train=False)
    assert out_odd.dtype == values_odd.dtype
    assert jnp.allclose(out_odd.astype(jnp.float32),
                        ref_odd.astype(jnp.float32),
                        atol=1e-2, rtol=1e-2), \
        "padded-rows mismatch vs reference"

    print("KERNEL_OK")
</pallas_src>

<mosaic_0001>
module attributes {stable_mosaic.version = 11 : i64} {
  func.func @_gate_mul_kernel(%arg0: i32, %arg1: memref<1x128xf32, #tpu.memory_space<vmem>>, %arg2: memref<16x128xf32, #tpu.memory_space<vmem>>, %arg3: memref<16x128xf32, #tpu.memory_space<vmem>>) attributes {dimension_semantics = [#tpu.dimension_semantics<parallel>], iteration_bounds = array<i64: 1>, scalar_prefetch = 0 : i64, scratch_operands = 0 : i64, tpu.core_type = #tpu.core_type<tc>, window_params = [{pipeline_mode = #tpu.pipeline_mode<synchronous>, transform_indices = @transform_0, window_bounds = array<i64: 1, 128>}, {transform_indices = @transform_1, window_bounds = array<i64: 16, 128>}, {transform_indices = @transform_2, window_bounds = array<i64: 16, 128>}]} {
    %c0 = arith.constant 0 : index
    %c0_0 = arith.constant 0 : index
    %0 = vector.load %arg1[%c0, %c0_0] : memref<1x128xf32, #tpu.memory_space<vmem>>, vector<1x128xf32>
    %1 = arith.negf %0 : vector<1x128xf32>
    %2 = math.exp %1 : vector<1x128xf32>
    %cst = arith.constant 1.000000e+00 : f32
    %3 = vector.broadcast %cst : f32 to vector<1x128xf32>
    %4 = arith.addf %3, %2 : vector<1x128xf32>
    %5 = arith.divf %3, %4 : vector<1x128xf32>
    %cst_1 = arith.constant 1.200000e+00 : f32
    %6 = vector.broadcast %cst_1 : f32 to vector<1x128xf32>
    %7 = arith.mulf %5, %6 : vector<1x128xf32>
    %cst_2 = arith.constant -1.000000e-01 : f32
    %8 = vector.broadcast %cst_2 : f32 to vector<1x128xf32>
    %9 = arith.addf %7, %8 : vector<1x128xf32>
    %cst_3 = arith.constant 0.000000e+00 : f32
    %cst_4 = arith.constant 1.000000e+00 : f32
    %10 = vector.broadcast %cst_3 : f32 to vector<1x128xf32>
    %11 = arith.maximumf %10, %9 : vector<1x128xf32>
    %12 = vector.broadcast %cst_4 : f32 to vector<1x128xf32>
    %13 = arith.minimumf %12, %11 : vector<1x128xf32>
    %c0_5 = arith.constant 0 : index
    %c0_6 = arith.constant 0 : index
    %14 = vector.load %arg2[%c0_5, %c0_6] : memref<16x128xf32, #tpu.memory_space<vmem>>, vector<16x128xf32>
    %15 = vector.broadcast %13 : vector<1x128xf32> to vector<16x128xf32>
    %16 = arith.mulf %14, %15 : vector<16x128xf32>
    %c0_7 = arith.constant 0 : index
    %c0_8 = arith.constant 0 : index
    %17 = vector.load %arg3[%c0_7, %c0_8] : memref<16x128xf32, #tpu.memory_space<vmem>>, vector<16x128xf32>
    tpu.vector_store %arg3[%c0_7, %c0_8], %16 {strides = array<i32>} : memref<16x128xf32, #tpu.memory_space<vmem>>, vector<16x128xf32>,
    return
  }
  func.func @transform_0(%arg0: i32) -> (i32, i32) {
    %c0_i32 = arith.constant 0 : i32
    %c0_i32_0 = arith.constant 0 : i32
    %c0_i32_1 = arith.constant 0 : i32
    return %c0_i32, %c0_i32_0 : i32, i32
  }
  func.func @transform_1(%arg0: i32) -> (i32, i32) {
    %c0_i32 = arith.constant 0 : i32
    %c0_i32_0 = arith.constant 0 : i32
    return %arg0, %c0_i32 : i32, i32
  }
  func.func @transform_2(%arg0: i32) -> (i32, i32) {
    %c0_i32 = arith.constant 0 : i32
    %c0_i32_0 = arith.constant 0 : i32
    return %arg0, %c0_i32 : i32, i32
  }
}

</mosaic_0001>

<llo_original>
// kernel: concrete_gate_forward.1
$region0: #{concrete_gate_forward.1}
  #allocation0 [shape = 'u32[]', space=smem, size = 0x4, offset = 0x4, fixed_abs, tag = 'smem constant byte address 0x4 - core index']
  #allocation1 [shape = 'u32[144,128]{1,0:T(1,128)}', space=vmem, size = 0x12000, scoped, tag = 'internal scratch']
  %s0 = inlined_call_operand.vmem [shape: f32[1,128], index: 0, kind: input, shape index: {}]
  %s1 = inlined_call_operand.hbm [shape: f32[16,128], index: 1, kind: input, shape index: {}]
  %s2 = inlined_call_operand.hbm [shape: f32[16,128], index: 2, kind: output, shape index: {}]
  %s3 = sld [smem:[#allocation0]]
  $region22: #{concrete_gate_forward.1} parent=0
    _
  %s5 = ssub.s32 1, %s3
  %s6 = scalar_select 0, %s5, %s3
  $region1: #{concrete_gate_forward.1} parent=0
    #allocation2 [shape = 'u8[8192]{0}', space=vmem, size = 0x2000, scoped, tag = 'input window, operand 1, single buffered']
    #allocation3 [shape = 's32[1]{0}', space=sflag, size = 0x4, scoped, tag = 'scoped memory for concrete_gate_forward.1']
    #allocation4 [shape = 's32[1]{0}', space=sflag, size = 0x4, scoped, tag = 'scoped memory for concrete_gate_forward.1']
    #allocation5 [shape = 'u8[8192]{0}', space=vmem, size = 0x2000, scoped, tag = 'output window, operand 0, single buffered']
    %7 = vsyncpa [#allocation3], 0
    %8 = vsyncpa [#allocation4], 0
    // Predicated region
    $region2: #{concrete_gate_forward.1} parent=1 // pred_check
      _
    $region3: #{concrete_gate_forward.1} parent=1 // pred_check_branch
      %10 = sbr.rel (0) target = $region5
    $region4: #{concrete_gate_forward.1} parent=1 // pred_region
      _
    $region5: #{concrete_gate_forward.1} parent=1 // pred_fallthru
      _
    // Predicated region
    $region6: #{concrete_gate_forward.1} parent=1 // pred_check
      _
    $region7: #{concrete_gate_forward.1} parent=1 // pred_check_branch
      %12 = sbr.rel (0) target = $region9
    $region8: #{concrete_gate_forward.1} parent=1 // pred_region
      %s14 = ssub.s32 256, 256
      %15 = vsyncadd [#allocation3], %s14
      %s16 = sshll.u32 [#allocation2], 4
      %s17 = int_to_ptr.vmem [resolvable:$true] %s16
      %22 = dma.hbm_to_vmem [thread:$0]  %s1, 256, %s17, [#allocation3], 128, 128, 8
    $region9: #{concrete_gate_forward.1} parent=1 // pred_fallthru
      _
    // Predicated region
    $region10: #{concrete_gate_forward.1} parent=1 // pred_check
      _
    $region11: #{concrete_gate_forward.1} parent=1 // pred_check_branch
      %24 = sbr.rel (0) target = $region13
    $region12: #{concrete_gate_forward.1} parent=1 // pred_region
      %25 = dma.done [#allocation3], 256
    $region13: #{concrete_gate_forward.1} parent=1 // pred_fallthru
      _
    %v26 = vld [vmem:[%s0] sm:$0x1]
    %v27 = vxor.u32 %v26, 2147483648
    %v28 = vmul.f32 %v27, 1.442695
    %v29 = vpow.pop %v28
    %v30 = vadd.f32 %v29, 1.0
    %v31 = vrcp.pop %v30
    %v32 = vmul.f32 1.0, %v31
    %v33 = vmul.f32 %v32, 1.2
    %v34 = vadd.f32 %v33, -0.1
    %v35 = vmax.f32 %v34, 0.0
    %v36 = vmin.f32 %v35, 1.0
    %v37 = vld [vmem:[#allocation2] sm:$0xff]
    %v38 = vld [vmem:[#allocation2 + $0x8] sm:$0xff]
    %v40 = vlaneseq
    %v41 = vshrl.u32 %v40, 7
    %v42 = vsub.s32 0, %v41
    %v43 = vrot.slane %v36, %v42
    %v45 = vmul.f32 %v37, %v43
    %v46 = vmul.f32 %v38, %v43
    %47 = vst [vmem:[#allocation5] sm:$0xff] %v45
    %48 = vst [vmem:[#allocation5 + $0x8] sm:$0xff] %v46
    // Predicated region
    $region14: #{concrete_gate_forward.1} parent=1 // pred_check
      _
    $region15: #{concrete_gate_forward.1} parent=1 // pred_check_branch
      %50 = sbr.rel (0) target = $region17
    $region16: #{concrete_gate_forward.1} parent=1 // pred_region
      %s52 = ssub.s32 256, 256
      %53 = vsyncadd [#allocation4], %s52
      %s54 = sshll.u32 [#allocation5], 4
      %s55 = int_to_ptr.vmem [resolvable:$true] %s54
      %60 = dma.vmem_to_hbm [thread:$0]  %s55, 256, %s2, [#allocation4], 128, 128, 8
    $region17: #{concrete_gate_forward.1} parent=1 // pred_fallthru
      _
    // Predicated region
    $region18: #{concrete_gate_forward.1} parent=1 // pred_check
      _
    $region19: #{concrete_gate_forward.1} parent=1 // pred_check_branch
      %62 = sbr.rel (0) target = $region21
    $region20: #{concrete_gate_forward.1} parent=1 // pred_region
      %63 = dma.done [#allocation4], 256
    $region21: #{concrete_gate_forward.1} parent=1 // pred_fallthru
      _
    %64 = vsyncpa [#allocation3], 1
    %65 = vsyncpa [#allocation4], 1

</llo_original>
